<compile_context>
chip_gen: v7x
topology: tpu7x:2x2x1
jax: 0.10.0
libtpu: 0.0.40
codegen_flags: <defaults>
</compile_context>

<pallas_src>
import functools

import jax
import jax.numpy as jnp
from jax.experimental import pallas as pl
from jax.experimental.pallas import tpu as pltpu


def _round_up(x, m):
    return ((x + m - 1) // m) * m


def _retrieval_output_kernel(x_ref, w_ref, b_ref, gamma_ref, beta_ref, o_ref,
                             *, eps, inv_h):
    # x_ref:     (TM, H) input rows (also the residual source)
    # w_ref:     (H, H)  bf16 dense weight, stored (in, out) so h = x @ w
    # b_ref:     (1, H)  f32 dense bias
    # gamma_ref: (1, H)  f32 LayerNorm weight
    # beta_ref:  (1, H)  f32 LayerNorm bias
    x = x_ref[...].astype(jnp.float32)  # f32 for residual / LayerNorm

    # Dense on the MXU: bf16 operands, f32 accumulation; bias folded in.
    h = jnp.dot(x.astype(jnp.bfloat16), w_ref[...],
                preferred_element_type=jnp.float32)
    h = h + b_ref[...]

    # Dropout: eval mode == identity.
    # TODO(synk): training-mode dropout (random mask via pltpu.prng_*) not implemented.

    # Residual add in f32.
    y = h + x

    # LayerNorm over the hidden (lane) axis — single pass: var = E[y^2] - mean^2.
    s1 = jnp.sum(y, axis=-1, keepdims=True)
    s2 = jnp.sum(y * y, axis=-1, keepdims=True)
    mean = s1 * inv_h
    var = s2 * inv_h - mean * mean
    inv = jax.lax.rsqrt(var + eps)  # EUP slot
    out = (y - mean) * inv * gamma_ref[...] + beta_ref[...]

    o_ref[...] = out.astype(o_ref.dtype)


def _build_call(n_pad, h, block_rows, out_dtype, eps, *, single_buffer_params):
    kernel = functools.partial(_retrieval_output_kernel,
                               eps=float(eps), inv_h=1.0 / float(h))
    grid = (n_pad // block_rows,)

    def const_spec(shape):
        # Grid-invariant parameters: constant index_map; single VMEM buffer so
        # the resident (H, H) weight is not double-buffered.
        if single_buffer_params:
            return pl.BlockSpec(shape, lambda i: (0, 0),
                                pipeline_mode=pl.Buffered(1))
        return pl.BlockSpec(shape, lambda i: (0, 0))

    n_w_buf = 1 if single_buffer_params else 2
    x_bytes = jnp.dtype(jnp.float32).itemsize
    vmem_limit = int(min(
        2 * block_rows * h * x_bytes      # x tiles, double-buffered
        + 2 * block_rows * h * x_bytes    # out tiles, double-buffered
        + n_w_buf * h * h * 2             # resident weight (bf16)
        + 6 * h * 4                       # bias / gamma / beta
        + (8 << 20),                      # headroom for compiler temporaries
        96 * 1024 * 1024))

    cost = pl.CostEstimate(
        flops=2 * n_pad * h * h + 8 * n_pad * h,
        transcendentals=n_pad,                         # one rsqrt per row
        bytes_accessed=2 * n_pad * h * 4 + h * h * 2 + 3 * h * 4)

    return pl.pallas_call(
        kernel,
        out_shape=jax.ShapeDtypeStruct((n_pad, h), out_dtype),
        grid_spec=pltpu.PrefetchScalarGridSpec(
            num_scalar_prefetch=0,
            grid=grid,
            in_specs=[
                pl.BlockSpec((block_rows, h), lambda i: (i, 0)),  # x tile
                const_spec((h, h)),                               # weight (bf16)
                const_spec((1, h)),                               # bias
                const_spec((1, h)),                               # gamma
                const_spec((1, h)),                               # beta
            ],
            out_specs=pl.BlockSpec((block_rows, h), lambda i: (i, 0)),
        ),
        compiler_params=pltpu.CompilerParams(
            dimension_semantics=("parallel",),
            vmem_limit_bytes=vmem_limit),
        cost_estimate=cost,
    )


def _pick_block_rows(n, h):
    """VMEM-aware row tile: as big as fits beside the resident bf16 weight."""
    budget = 40 * 1024 * 1024                 # conservative (v7x has 64 MiB VMEM)
    weight_bytes = h * h * 2                  # single-buffered bf16 weight
    remaining = max(budget - weight_bytes - (4 << 20), 4 << 20)
    # x in (f32, double-buffered) + out (f32, double-buffered) = 16 * H bytes/row
    by_vmem = remaining // (16 * h)
    block_rows = int(min(512, by_vmem, _round_up(n, 8)))
    return max(8, _round_up(block_rows, 8) if block_rows >= 8 else 8)


def retrieval_output(x, w, b, gamma, beta, *, eps=1e-5, dropout_prob=0.1,
                     training=False, block_rows=None):
    """Fused RetrievalOutput forward.

    x: (N, H) float32 (N = batch*seq).  w: (H, H) stored (in, out).
    b / gamma / beta: (H,).  Residual requires in_features == out_features.
    """
    if training and dropout_prob > 0.0:
        raise NotImplementedError(
            "training-mode dropout is not implemented (eval mode only)")

    n, h = x.shape
    assert w.shape == (h, h), "residual requires in_features == out_features"

    if block_rows is None:
        block_rows = _pick_block_rows(n, h)
    block_rows = max(8, _round_up(int(block_rows), 8))

    n_pad = _round_up(n, block_rows)
    if n_pad != n:
        x = jnp.pad(x, ((0, n_pad - n), (0, 0)))

    w_bf16 = w.astype(jnp.bfloat16)   # halves weight DMA + VMEM residency
    b2 = b.reshape(1, h).astype(jnp.float32)
    g2 = gamma.reshape(1, h).astype(jnp.float32)
    be2 = beta.reshape(1, h).astype(jnp.float32)

    try:
        call = _build_call(n_pad, h, block_rows, x.dtype, eps,
                           single_buffer_params=True)
        out = call(x, w_bf16, b2, g2, be2)
    except Exception:
        # Fallback for JAX versions where pl.Buffered(1) is not accepted on a
        # pallas_call BlockSpec: accept default double-buffered params.
        call = _build_call(n_pad, h, block_rows, x.dtype, eps,
                           single_buffer_params=False)
        out = call(x, w_bf16, b2, g2, be2)

    return out[:n] if n_pad != n else out


def reference(x, w, b, gamma, beta, eps=1e-5):
    h = x @ w + b
    y = h + x
    mean = y.mean(-1, keepdims=True)
    var = ((y - mean) ** 2).mean(-1, keepdims=True)
    return (y - mean) / jnp.sqrt(var + eps) * gamma + beta


if __name__ == "__main__":
    # Module config: in_features == out_features == hidden (residual requires it).
    batch, seq, hidden = 2, 8, 32
    key = jax.random.PRNGKey(0)
    k_x, k_w, k_b, k_g, k_be = jax.random.split(key, 5)

    x_bsh = jax.random.normal(k_x, (batch, seq, hidden), dtype=jnp.float32)
    # Deterministic synthetic parameters (not a checkpoint load).
    w = jax.random.normal(k_w, (hidden, hidden), dtype=jnp.float32) * 0.05
    b = jax.random.normal(k_b, (hidden,), dtype=jnp.float32) * 0.05
    gamma = jnp.ones((hidden,), dtype=jnp.float32) \
            + 0.01 * jax.random.normal(k_g, (hidden,), dtype=jnp.float32)
    beta = 0.01 * jax.random.normal(k_be, (hidden,), dtype=jnp.float32)

    x = x_bsh.reshape(batch * seq, hidden)

    out = retrieval_output(x, w, b, gamma, beta, eps=1e-5, training=False)
    out = jax.block_until_ready(out)

    ref = reference(x, w, b, gamma, beta, eps=1e-5)
    assert out.shape == (batch * seq, hidden)
    # Tolerance relaxed vs the f32 reference because the matmul uses bf16
    # operands (f32 accumulation); residual + LayerNorm stay in f32.
    assert jnp.allclose(out, ref, atol=2e-2, rtol=2e-2), \
        f"max err {jnp.max(jnp.abs(out - ref))}"

    # Reshape back to (batch, seq, hidden) to match the PyTorch output shape.
    _ = out.reshape(batch, seq, hidden)

    print("KERNEL_OK")
</pallas_src>

<mosaic_0001>
module attributes {stable_mosaic.version = 11 : i64} {
  func.func @_retrieval_output_kernel(%arg0: i32, %arg1: memref<16x32xf32, #tpu.memory_space<vmem>>, %arg2: memref<32x32xbf16, #tpu.memory_space<vmem>>, %arg3: memref<1x32xf32, #tpu.memory_space<vmem>>, %arg4: memref<1x32xf32, #tpu.memory_space<vmem>>, %arg5: memref<1x32xf32, #tpu.memory_space<vmem>>, %arg6: memref<16x32xf32, #tpu.memory_space<vmem>>) attributes {dimension_semantics = [#tpu.dimension_semantics<parallel>], iteration_bounds = array<i64: 1>, scalar_prefetch = 0 : i64, scratch_operands = 0 : i64, tpu.core_type = #tpu.core_type<tc>, window_params = [{transform_indices = @transform_0, window_bounds = array<i64: 16, 32>}, {pipeline_mode = #tpu.pipeline_mode<synchronous>, transform_indices = @transform_1, window_bounds = array<i64: 32, 32>}, {pipeline_mode = #tpu.pipeline_mode<synchronous>, transform_indices = @transform_2, window_bounds = array<i64: 1, 32>}, {pipeline_mode = #tpu.pipeline_mode<synchronous>, transform_indices = @transform_3, window_bounds = array<i64: 1, 32>}, {pipeline_mode = #tpu.pipeline_mode<synchronous>, transform_indices = @transform_4, window_bounds = array<i64: 1, 32>}, {transform_indices = @transform_5, window_bounds = array<i64: 16, 32>}]} {
    %c0 = arith.constant 0 : index
    %c0_0 = arith.constant 0 : index
    %0 = vector.load %arg1[%c0, %c0_0] : memref<16x32xf32, #tpu.memory_space<vmem>>, vector<16x32xf32>
    %1 = arith.truncf %0 : vector<16x32xf32> to vector<16x32xbf16>
    %c0_1 = arith.constant 0 : index
    %c0_2 = arith.constant 0 : index
    %2 = vector.load %arg2[%c0_1, %c0_2] : memref<32x32xbf16, #tpu.memory_space<vmem>>, vector<32x32xbf16>
    %cst = arith.constant dense<0.000000e+00> : vector<16x32xf32>
    %3 = tpu.matmul %1, %2, %cst {dimension_numbers = #tpu.dot_dimension_numbers<[1], [0], [0], [1], [0, 0, 1, 1], [], []>} : vector<16x32xbf16>, vector<32x32xbf16>, vector<16x32xf32> -> vector<16x32xf32>
    %c0_3 = arith.constant 0 : index
    %c0_4 = arith.constant 0 : index
    %4 = vector.load %arg3[%c0_3, %c0_4] : memref<1x32xf32, #tpu.memory_space<vmem>>, vector<1x32xf32>
    %5 = vector.broadcast %4 : vector<1x32xf32> to vector<16x32xf32>
    %6 = arith.addf %3, %5 : vector<16x32xf32>
    %7 = arith.addf %6, %0 : vector<16x32xf32>
    %cst_5 = arith.constant dense<0.000000e+00> : vector<16xf32>
    %8 = vector.multi_reduction <add>, %7, %cst_5 [1] : vector<16x32xf32> to vector<16xf32>
    %9 = vector.shape_cast %8 : vector<16xf32> to vector<16x1xf32>
    %10 = arith.mulf %7, %7 : vector<16x32xf32>
    %cst_6 = arith.constant dense<0.000000e+00> : vector<16xf32>
    %11 = vector.multi_reduction <add>, %10, %cst_6 [1] : vector<16x32xf32> to vector<16xf32>
    %12 = vector.shape_cast %11 : vector<16xf32> to vector<16x1xf32>
    %cst_7 = arith.constant 3.125000e-02 : f32
    %13 = vector.broadcast %cst_7 : f32 to vector<16x1xf32>
    %14 = arith.mulf %9, %13 : vector<16x1xf32>
    %cst_8 = arith.constant 3.125000e-02 : f32
    %15 = vector.broadcast %cst_8 : f32 to vector<16x1xf32>
    %16 = arith.mulf %12, %15 : vector<16x1xf32>
    %17 = arith.mulf %14, %14 : vector<16x1xf32>
    %18 = arith.subf %16, %17 : vector<16x1xf32>
    %cst_9 = arith.constant 9.99999974E-6 : f32
    %19 = vector.broadcast %cst_9 : f32 to vector<16x1xf32>
    %20 = arith.addf %18, %19 : vector<16x1xf32>
    %21 = math.rsqrt %20 : vector<16x1xf32>
    %22 = vector.broadcast %14 : vector<16x1xf32> to vector<16x32xf32>
    %23 = arith.subf %7, %22 : vector<16x32xf32>
    %24 = vector.broadcast %21 : vector<16x1xf32> to vector<16x32xf32>
    %25 = arith.mulf %23, %24 : vector<16x32xf32>
    %c0_10 = arith.constant 0 : index
    %c0_11 = arith.constant 0 : index
    %26 = vector.load %arg4[%c0_10, %c0_11] : memref<1x32xf32, #tpu.memory_space<vmem>>, vector<1x32xf32>
    %27 = vector.broadcast %26 : vector<1x32xf32> to vector<16x32xf32>
    %28 = arith.mulf %25, %27 : vector<16x32xf32>
    %c0_12 = arith.constant 0 : index
    %c0_13 = arith.constant 0 : index
    %29 = vector.load %arg5[%c0_12, %c0_13] : memref<1x32xf32, #tpu.memory_space<vmem>>, vector<1x32xf32>
    %30 = vector.broadcast %29 : vector<1x32xf32> to vector<16x32xf32>
    %31 = arith.addf %28, %30 : vector<16x32xf32>
    %c0_14 = arith.constant 0 : index
    %c0_15 = arith.constant 0 : index
    %32 = vector.load %arg6[%c0_14, %c0_15] : memref<16x32xf32, #tpu.memory_space<vmem>>, vector<16x32xf32>
    tpu.vector_store %arg6[%c0_14, %c0_15], %31 {strides = array<i32>} : memref<16x32xf32, #tpu.memory_space<vmem>>, vector<16x32xf32>,
    return
  }
  func.func @transform_0(%arg0: i32) -> (i32, i32) {
    %c0_i32 = arith.constant 0 : i32
    %c0_i32_0 = arith.constant 0 : i32
    return %arg0, %c0_i32 : i32, i32
  }
  func.func @transform_1(%arg0: i32) -> (i32, i32) {
    %c0_i32 = arith.constant 0 : i32
    %c0_i32_0 = arith.constant 0 : i32
    %c0_i32_1 = arith.constant 0 : i32
    return %c0_i32, %c0_i32_0 : i32, i32
  }
  func.func @transform_2(%arg0: i32) -> (i32, i32) {
    %c0_i32 = arith.constant 0 : i32
    %c0_i32_0 = arith.constant 0 : i32
    %c0_i32_1 = arith.constant 0 : i32
    return %c0_i32, %c0_i32_0 : i32, i32
  }
  func.func @transform_3(%arg0: i32) -> (i32, i32) {
    %c0_i32 = arith.constant 0 : i32
    %c0_i32_0 = arith.constant 0 : i32
    %c0_i32_1 = arith.constant 0 : i32
    return %c0_i32, %c0_i32_0 : i32, i32
  }
  func.func @transform_4(%arg0: i32) -> (i32, i32) {
    %c0_i32 = arith.constant 0 : i32
    %c0_i32_0 = arith.constant 0 : i32
    %c0_i32_1 = arith.constant 0 : i32
    return %c0_i32, %c0_i32_0 : i32, i32
  }
  func.func @transform_5(%arg0: i32) -> (i32, i32) {
    %c0_i32 = arith.constant 0 : i32
    %c0_i32_0 = arith.constant 0 : i32
    return %arg0, %c0_i32 : i32, i32
  }
}

module attributes {stable_mosaic.version = 11 : i64} {
  func.func @_retrieval_output_kernel(%arg0: i32, %arg1: memref<16x32xf32, #tpu.memory_space<vmem>>, %arg2: memref<32x32xbf16, #tpu.memory_space<vmem>>, %arg3: memref<1x32xf32, #tpu.memory_space<vmem>>, %arg4: memref<1x32xf32, #tpu.memory_space<vmem>>, %arg5: memref<1x32xf32, #tpu.memory_space<vmem>>, %arg6: memref<16x32xf32, #tpu.memory_space<vmem>>) attributes {dimension_semantics = [#tpu.dimension_semantics<parallel>], iteration_bounds = array<i64: 1>, scalar_prefetch = 0 : i64, scratch_operands = 0 : i64, tpu.core_type = #tpu.core_type<tc>, window_params = [{transform_indices = @transform_0, window_bounds = array<i64: 16, 32>}, {pipeline_mode = #tpu.pipeline_mode<synchronous>, transform_indices = @transform_1, window_bounds = array<i64: 32, 32>}, {pipeline_mode = #tpu.pipeline_mode<synchronous>, transform_indices = @transform_2, window_bounds = array<i64: 1, 32>}, {pipeline_mode = #tpu.pipeline_mode<synchronous>, transform_indices = @transform_3, window_bounds = array<i64: 1, 32>}, {pipeline_mode = #tpu.pipeline_mode<synchronous>, transform_indices = @transform_4, window_bounds = array<i64: 1, 32>}, {transform_indices = @transform_5, window_bounds = array<i64: 16, 32>}]} {
    %c0 = arith.constant 0 : index
    %c0_0 = arith.constant 0 : index
    %0 = vector.load %arg1[%c0, %c0_0] : memref<16x32xf32, #tpu.memory_space<vmem>>, vector<16x32xf32>
    %1 = arith.truncf %0 : vector<16x32xf32> to vector<16x32xbf16>
    %c0_1 = arith.constant 0 : index
    %c0_2 = arith.constant 0 : index
    %2 = vector.load %arg2[%c0_1, %c0_2] : memref<32x32xbf16, #tpu.memory_space<vmem>>, vector<32x32xbf16>
    %cst = arith.constant dense<0.000000e+00> : vector<16x32xf32>
    %3 = tpu.matmul %1, %2, %cst {dimension_numbers = #tpu.dot_dimension_numbers<[1], [0], [0], [1], [0, 0, 1, 1], [], []>} : vector<16x32xbf16>, vector<32x32xbf16>, vector<16x32xf32> -> vector<16x32xf32>
    %c0_3 = arith.constant 0 : index
    %c0_4 = arith.constant 0 : index
    %4 = vector.load %arg3[%c0_3, %c0_4] : memref<1x32xf32, #tpu.memory_space<vmem>>, vector<1x32xf32>
    %5 = vector.broadcast %4 : vector<1x32xf32> to vector<16x32xf32>
    %6 = arith.addf %3, %5 : vector<16x32xf32>
    %7 = arith.addf %6, %0 : vector<16x32xf32>
    %cst_5 = arith.constant dense<0.000000e+00> : vector<16xf32>
    %8 = vector.multi_reduction <add>, %7, %cst_5 [1] : vector<16x32xf32> to vector<16xf32>
    %9 = vector.shape_cast %8 : vector<16xf32> to vector<16x1xf32>
    %10 = arith.mulf %7, %7 : vector<16x32xf32>
    %cst_6 = arith.constant dense<0.000000e+00> : vector<16xf32>
    %11 = vector.multi_reduction <add>, %10, %cst_6 [1] : vector<16x32xf32> to vector<16xf32>
    %12 = vector.shape_cast %11 : vector<16xf32> to vector<16x1xf32>
    %cst_7 = arith.constant 3.125000e-02 : f32
    %13 = vector.broadcast %cst_7 : f32 to vector<16x1xf32>
    %14 = arith.mulf %9, %13 : vector<16x1xf32>
    %cst_8 = arith.constant 3.125000e-02 : f32
    %15 = vector.broadcast %cst_8 : f32 to vector<16x1xf32>
    %16 = arith.mulf %12, %15 : vector<16x1xf32>
    %17 = arith.mulf %14, %14 : vector<16x1xf32>
    %18 = arith.subf %16, %17 : vector<16x1xf32>
    %cst_9 = arith.constant 9.99999974E-6 : f32
    %19 = vector.broadcast %cst_9 : f32 to vector<16x1xf32>
    %20 = arith.addf %18, %19 : vector<16x1xf32>
    %21 = math.rsqrt %20 : vector<16x1xf32>
    %22 = vector.broadcast %14 : vector<16x1xf32> to vector<16x32xf32>
    %23 = arith.subf %7, %22 : vector<16x32xf32>
    %24 = vector.broadcast %21 : vector<16x1xf32> to vector<16x32xf32>
    %25 = arith.mulf %23, %24 : vector<16x32xf32>
    %c0_10 = arith.constant 0 : index
    %c0_11 = arith.constant 0 : index
    %26 = vector.load %arg4[%c0_10, %c0_11] : memref<1x32xf32, #tpu.memory_space<vmem>>, vector<1x32xf32>
    %27 = vector.broadcast %26 : vector<1x32xf32> to vector<16x32xf32>
    %28 = arith.mulf %25, %27 : vector<16x32xf32>
    %c0_12 = arith.constant 0 : index
    %c0_13 = arith.constant 0 : index
    %29 = vector.load %arg5[%c0_12, %c0_13] : memref<1x32xf32, #tpu.memory_space<vmem>>, vector<1x32xf32>
    %30 = vector.broadcast %29 : vector<1x32xf32> to vector<16x32xf32>
    %31 = arith.addf %28, %30 : vector<16x32xf32>
    %c0_14 = arith.constant 0 : index
    %c0_15 = arith.constant 0 : index
    %32 = vector.load %arg6[%c0_14, %c0_15] : memref<16x32xf32, #tpu.memory_space<vmem>>, vector<16x32xf32>
    tpu.vector_store %arg6[%c0_14, %c0_15], %31 {strides = array<i32>} : memref<16x32xf32, #tpu.memory_space<vmem>>, vector<16x32xf32>,
    return
  }
  func.func @transform_0(%arg0: i32) -> (i32, i32) {
    %c0_i32 = arith.constant 0 : i32
    %c0_i32_0 = arith.constant 0 : i32
    return %arg0, %c0_i32 : i32, i32
  }
  func.func @transform_1(%arg0: i32) -> (i32, i32) {
    %c0_i32 = arith.constant 0 : i32
    %c0_i32_0 = arith.constant 0 : i32
    %c0_i32_1 = arith.constant 0 : i32
    return %c0_i32, %c0_i32_0 : i32, i32
  }
  func.func @transform_2(%arg0: i32) -> (i32, i32) {
    %c0_i32 = arith.constant 0 : i32
    %c0_i32_0 = arith.constant 0 : i32
    %c0_i32_1 = arith.constant 0 : i32
    return %c0_i32, %c0_i32_0 : i32, i32
  }
  func.func @transform_3(%arg0: i32) -> (i32, i32) {
    %c0_i32 = arith.constant 0 : i32
    %c0_i32_0 = arith.constant 0 : i32
    %c0_i32_1 = arith.constant 0 : i32
    return %c0_i32, %c0_i32_0 : i32, i32
  }
  func.func @transform_4(%arg0: i32) -> (i32, i32) {
    %c0_i32 = arith.constant 0 : i32
    %c0_i32_0 = arith.constant 0 : i32
    %c0_i32_1 = arith.constant 0 : i32
    return %c0_i32, %c0_i32_0 : i32, i32
  }
  func.func @transform_5(%arg0: i32) -> (i32, i32) {
    %c0_i32 = arith.constant 0 : i32
    %c0_i32_0 = arith.constant 0 : i32
    return %arg0, %c0_i32 : i32, i32
  }
}

</mosaic_0001>

<llo_original>
// kernel: tpu_custom_call.1
$region0: #{tpu_custom_call.1}
  #allocation0 [shape = 'u32[]', space=smem, size = 0x4, offset = 0x4, fixed_abs, tag = 'smem constant byte address 0x4 - core index']
  #allocation1 [shape = 'u32[144,128]{1,0:T(1,128)}', space=vmem, size = 0x12000, scoped, tag = 'internal scratch']
  %s0 = inlined_call_operand.hbm [shape: f32[16,32], index: 0, kind: input, shape index: {}]
  %s1 = inlined_call_operand.hbm [shape: bf16[32,32], index: 1, kind: input, shape index: {}]
  %s2 = inlined_call_operand.vmem [shape: f32[1,32], index: 2, kind: input, shape index: {}]
  %s3 = inlined_call_operand.vmem [shape: f32[1,32], index: 3, kind: input, shape index: {}]
  %s4 = inlined_call_operand.vmem [shape: f32[1,32], index: 4, kind: input, shape index: {}]
  %s5 = inlined_call_operand.hbm [shape: f32[16,32], index: 5, kind: output, shape index: {}]
  %s6 = sld [smem:[#allocation0]]
  $region38: #{tpu_custom_call.1} parent=0
    _
  %s8 = ssub.s32 1, %s6
  %s9 = scalar_select 0, %s8, %s6
  $region1: #{tpu_custom_call.1} parent=0
    #allocation2 [shape = 'u8[8192]{0}', space=vmem, size = 0x2000, scoped, tag = 'input window, operand 0, single buffered']
    #allocation3 [shape = 's32[1]{0}', space=sflag, size = 0x4, scoped, tag = 'scoped memory for tpu_custom_call.1']
    #allocation4 [shape = 's32[1]{0}', space=sflag, size = 0x4, scoped, tag = 'scoped memory for tpu_custom_call.1']
    #allocation5 [shape = 'u8[8192]{0}', space=vmem, size = 0x2000, scoped, tag = 'input window, operand 1, single buffered']
    #allocation6 [shape = 's32[1]{0}', space=sflag, size = 0x4, scoped, tag = 'scoped memory for tpu_custom_call.1']
    #allocation7 [shape = 'u8[8192]{0}', space=vmem, size = 0x2000, scoped, tag = 'output window, operand 0, single buffered']
    %10 = vsyncpa [#allocation3], 0
    %11 = vsyncpa [#allocation6], 0
    %12 = vsyncpa [#allocation4], 0
    // Predicated region
    $region2: #{tpu_custom_call.1} parent=1 // pred_check
      _
    $region3: #{tpu_custom_call.1} parent=1 // pred_check_branch
      %14 = sbr.rel (0) target = $region5
    $region4: #{tpu_custom_call.1} parent=1 // pred_region
      %s16 = ssub.s32 256, 256
      %17 = vsyncadd [#allocation3], %s16
      %s18 = sshll.u32 [#allocation2], 4
      %s19 = int_to_ptr.vmem [resolvable:$true] %s18
      %24 = dma.hbm_to_vmem [thread:$0]  %s0, 256, %s19, [#allocation3], 128, 128, 8
    $region5: #{tpu_custom_call.1} parent=1 // pred_fallthru
      _
    // Predicated region
    $region6: #{tpu_custom_call.1} parent=1 // pred_check
      _
    $region7: #{tpu_custom_call.1} parent=1 // pred_check_branch
      %26 = sbr.rel (0) target = $region9
    $region8: #{tpu_custom_call.1} parent=1 // pred_region
      %s28 = ssub.s32 256, 256
      %29 = vsyncadd [#allocation6], %s28
      %s30 = sshll.u32 [#allocation5], 4
      %s31 = int_to_ptr.vmem [resolvable:$true] %s30
      %36 = dma.hbm_to_vmem [thread:$0]  %s1, 256, %s31, [#allocation6], 64, 64, 4
    $region9: #{tpu_custom_call.1} parent=1 // pred_fallthru
      _
    // Predicated region
    $region10: #{tpu_custom_call.1} parent=1 // pred_check
      _
    $region11: #{tpu_custom_call.1} parent=1 // pred_check_branch
      %38 = sbr.rel (0) target = $region13
    $region12: #{tpu_custom_call.1} parent=1 // pred_region
      _
    $region13: #{tpu_custom_call.1} parent=1 // pred_fallthru
      _
    // Predicated region
    $region14: #{tpu_custom_call.1} parent=1 // pred_check
      _
    $region15: #{tpu_custom_call.1} parent=1 // pred_check_branch
      %40 = sbr.rel (0) target = $region17
    $region16: #{tpu_custom_call.1} parent=1 // pred_region
      _
    $region17: #{tpu_custom_call.1} parent=1 // pred_fallthru
      _
    // Predicated region
    $region18: #{tpu_custom_call.1} parent=1 // pred_check
      _
    $region19: #{tpu_custom_call.1} parent=1 // pred_check_branch
      %42 = sbr.rel (0) target = $region21
    $region20: #{tpu_custom_call.1} parent=1 // pred_region
      _
    $region21: #{tpu_custom_call.1} parent=1 // pred_fallthru
      _
    // Predicated region
    $region22: #{tpu_custom_call.1} parent=1 // pred_check
      _
    $region23: #{tpu_custom_call.1} parent=1 // pred_check_branch
      %44 = sbr.rel (0) target = $region25
    $region24: #{tpu_custom_call.1} parent=1 // pred_region
      %45 = dma.done [#allocation3], 256
    $region25: #{tpu_custom_call.1} parent=1 // pred_fallthru
      _
    // Predicated region
    $region26: #{tpu_custom_call.1} parent=1 // pred_check
      _
    $region27: #{tpu_custom_call.1} parent=1 // pred_check_branch
      %47 = sbr.rel (0) target = $region29
    $region28: #{tpu_custom_call.1} parent=1 // pred_region
      %48 = dma.done [#allocation6], 256
    $region29: #{tpu_custom_call.1} parent=1 // pred_fallthru
      _
    %v50 = vld [vmem:[#allocation2] sm:$0xff]
    %v51 = vld [vmem:[#allocation2 + $0x8] sm:$0xff]
    %v52 = vpack.c.bf16 %v51, %v50
    %v53 = vld [vmem:[#allocation5] sm:$0xf]
    %v54 = vld [vmem:[#allocation5 + $0x4] sm:$0xf]
    %v55 = vld [vmem:[#allocation5 + $0x8] sm:$0xf]
    %v56 = vld [vmem:[#allocation5 + $0xc] sm:$0xf]
    %v57 = vld [vmem:[%s2] sm:$0x1]
    %v59 = vlaneseq
    %v60 = vshrl.u32 %v59, 7
    %v61 = vsub.s32 0, %v60
    %v62 = vrot.slane %v57, %v61
    %v68 = vunpack.c.l.b16 %v53
    %v69 = vunpack.c.l.b16 %v54
    %v70 = vunpack.c.l.b16 %v55
    %v71 = vunpack.c.l.b16 %v56
    %v72 = vpack.c.b16 %v69, %v68
    %v73 = vpack.c.b16 %v71, %v70
    %vm76 = vcmask 261120
    %v78 = vsel %vm76, %v52, 0
    %80 = vmatprep.subr.bf16.mxu0 0
    %81 = vmatpush1.bf16.msra.mxu0 %v72
    %82 = vmatprep.subr.bf16.mxu0 0
    %83 = vmatpush1.bf16.msra.mxu0 %v73
    %84 = vmatprep.subr.bf16.mxu0 0
    %85 = vmatpush1.bf16.msra.mxu0 0
    %86 = vmatprep.subr.bf16.mxu0 0
    %87 = vmatpush1.bf16.msra.mxu0 0
    %88 = vmatprep.subr.bf16.mxu0 0
    %89 = vmatpush1.bf16.msra.mxu0 0
    %90 = vmatprep.subr.bf16.mxu0 0
    %91 = vmatpush1.bf16.msra.mxu0 0
    %92 = vmatprep.subr.bf16.mxu0 0
    %93 = vmatpush1.bf16.msra.mxu0 0
    %94 = vmatprep.subr.bf16.mxu0 0
    %95 = vmatpush1.bf16.msra.mxu0 0
    %96 = vmatprep.subr.bf16.mxu0 0
    %97 = vmatpush1.bf16.msra.mxu0 0
    %98 = vmatprep.subr.bf16.mxu0 0
    %99 = vmatpush1.bf16.msra.mxu0 0
    %100 = vmatprep.subr.bf16.mxu0 0
    %101 = vmatpush1.bf16.msra.mxu0 0
    %102 = vmatprep.subr.bf16.mxu0 0
    %103 = vmatpush1.bf16.msra.mxu0 0
    %104 = vmatprep.subr.bf16.mxu0 0
    %105 = vmatpush1.bf16.msra.mxu0 0
    %106 = vmatprep.subr.bf16.mxu0 0
    %107 = vmatpush1.bf16.msra.mxu0 0
    %108 = vmatprep.subr.bf16.mxu0 0
    %109 = vmatpush1.bf16.msra.mxu0 0
    %110 = vmatprep.subr.bf16.mxu0 0
    %111 = vmatpush1.bf16.msra.mxu0 0
    %112 = vmatprep.mubr.bf16.mxu0 0
    %113 = vmatmul.mubr.bf16.gmra.mrb[0].mxu0 %v78
    %v114 = vpop.f32.mrb[0].mxu0
    %v115 = vadd.f32 %v62, %v114
    %v116 = vpop.f32.mrb[0].mxu0
    %v117 = vpop.f32.mrb[0].mxu0
    %v118 = vadd.f32 %v62, %v117
    %v119 = vpop.f32.mrb[0].mxu0
    %120 = vdwg.mxu0
    %v121 = vadd.f32 %v115, %v50
    %v122 = vadd.f32 %v118, %v51
    %v123 = vsel %vm76, %v121, 0.0
    %124 = vadd.xlane.f32.xlu0 %v123
    %v125 = vpop.xlane.xlu0 %124
    %v126 = vsel %vm76, %v122, 0.0
    %127 = vadd.xlane.f32.xlu0 %v126
    %v128 = vpop.xlane.xlu0 %127
    %v129 = vmul.f32 %v121, %v121
    %v130 = vmul.f32 %v122, %v122
    %v131 = vsel %vm76, %v129, 0.0
    %132 = vadd.xlane.f32.xlu0 %v131
    %v133 = vpop.xlane.xlu0 %132
    %v134 = vsel %vm76, %v130, 0.0
    %135 = vadd.xlane.f32.xlu0 %v134
    %v136 = vpop.xlane.xlu0 %135
    %v137 = vmul.f32 %v125, 0.03125
    %v138 = vmul.f32 %v128, 0.03125
    %v139 = vmul.f32 %v133, 0.03125
    %v140 = vmul.f32 %v136, 0.03125
    %v141 = vmul.f32 %v137, %v137
    %v142 = vmul.f32 %v138, %v138
    %v143 = vsub.f32 %v139, %v141
    %v144 = vsub.f32 %v140, %v142
    %v145 = vadd.f32 %v143, 1e-05
    %v146 = vadd.f32 %v144, 1e-05
    %v147 = vrsqrt.pop %v145
    %v148 = vrsqrt.pop %v146
    %v149 = vsub.f32 %v121, %v137
    %v150 = vsub.f32 %v122, %v138
    %v151 = vmul.f32 %v149, %v147
    %v152 = vmul.f32 %v150, %v148
    %v153 = vld [vmem:[%s3] sm:$0x1]
    %v155 = vlaneseq
    %v156 = vshrl.u32 %v155, 7
    %v157 = vsub.s32 0, %v156
    %v158 = vrot.slane %v153, %v157
    %v160 = vmul.f32 %v151, %v158
    %v161 = vmul.f32 %v152, %v158
    %v162 = vld [vmem:[%s4] sm:$0x1]
    %v164 = vlaneseq
    %v165 = vshrl.u32 %v164, 7
    %v166 = vsub.s32 0, %v165
    %v167 = vrot.slane %v162, %v166
    %v169 = vadd.f32 %v160, %v167
    %v170 = vadd.f32 %v161, %v167
    %171 = vst.msk [vmem:[#allocation7] sm:$0xff] %vm76, %v169
    %172 = vst.msk [vmem:[#allocation7 + $0x8] sm:$0xff] %vm76, %v170
    // Predicated region
    $region30: #{tpu_custom_call.1} parent=1 // pred_check
      _
    $region31: #{tpu_custom_call.1} parent=1 // pred_check_branch
      %174 = sbr.rel (0) target = $region33
    $region32: #{tpu_custom_call.1} parent=1 // pred_region
      %s176 = ssub.s32 256, 256
      %177 = vsyncadd [#allocation4], %s176
      %s178 = sshll.u32 [#allocation7], 4
      %s179 = int_to_ptr.vmem [resolvable:$true] %s178
      %184 = dma.vmem_to_hbm [thread:$0]  %s179, 256, %s5, [#allocation4], 128, 128, 8
    $region33: #{tpu_custom_call.1} parent=1 // pred_fallthru
      _
    // Predicated region
    $region34: #{tpu_custom_call.1} parent=1 // pred_check
      _
    $region35: #{tpu_custom_call.1} parent=1 // pred_check_branch
      %186 = sbr.rel (0) target = $region37
    $region36: #{tpu_custom_call.1} parent=1 // pred_region
      %187 = dma.done [#allocation4], 256
    $region37: #{tpu_custom_call.1} parent=1 // pred_fallthru
      _
    %188 = vsyncpa [#allocation3], 1
    %189 = vsyncpa [#allocation6], 1
    %190 = vsyncpa [#allocation4], 1

// kernel: tpu_custom_call.1
$region0: #{tpu_custom_call.1}
  #allocation0 [shape = 'u32[]', space=smem, size = 0x4, offset = 0x4, fixed_abs, tag = 'smem constant byte address 0x4 - core index']
  #allocation1 [shape = 'u32[144,128]{1,0:T(1,128)}', space=vmem, size = 0x12000, scoped, tag = 'internal scratch']
  %s0 = inlined_call_operand.hbm [shape: f32[16,32], index: 0, kind: input, shape index: {}]
  %s1 = inlined_call_operand.hbm [shape: bf16[32,32], index: 1, kind: input, shape index: {}]
  %s2 = inlined_call_operand.vmem [shape: f32[1,32], index: 2, kind: input, shape index: {}]
  %s3 = inlined_call_operand.vmem [shape: f32[1,32], index: 3, kind: input, shape index: {}]
  %s4 = inlined_call_operand.vmem [shape: f32[1,32], index: 4, kind: input, shape index: {}]
  %s5 = inlined_call_operand.hbm [shape: f32[16,32], index: 5, kind: output, shape index: {}]
  %s6 = sld [smem:[#allocation0]]
  $region38: #{tpu_custom_call.1} parent=0
    _
  %s8 = ssub.s32 1, %s6
  %s9 = scalar_select 0, %s8, %s6
  $region1: #{tpu_custom_call.1} parent=0
    #allocation2 [shape = 'u8[8192]{0}', space=vmem, size = 0x2000, scoped, tag = 'input window, operand 0, single buffered']
    #allocation3 [shape = 's32[1]{0}', space=sflag, size = 0x4, scoped, tag = 'scoped memory for tpu_custom_call.1']
    #allocation4 [shape = 's32[1]{0}', space=sflag, size = 0x4, scoped, tag = 'scoped memory for tpu_custom_call.1']
    #allocation5 [shape = 'u8[8192]{0}', space=vmem, size = 0x2000, scoped, tag = 'input window, operand 1, single buffered']
    #allocation6 [shape = 's32[1]{0}', space=sflag, size = 0x4, scoped, tag = 'scoped memory for tpu_custom_call.1']
    #allocation7 [shape = 'u8[8192]{0}', space=vmem, size = 0x2000, scoped, tag = 'output window, operand 0, single buffered']
    %10 = vsyncpa [#allocation3], 0
    %11 = vsyncpa [#allocation6], 0
    %12 = vsyncpa [#allocation4], 0
    // Predicated region
    $region2: #{tpu_custom_call.1} parent=1 // pred_check
      _
    $region3: #{tpu_custom_call.1} parent=1 // pred_check_branch
      %14 = sbr.rel (0) target = $region5
    $region4: #{tpu_custom_call.1} parent=1 // pred_region
      %s16 = ssub.s32 256, 256
      %17 = vsyncadd [#allocation3], %s16
      %s18 = sshll.u32 [#allocation2], 4
      %s19 = int_to_ptr.vmem [resolvable:$true] %s18
      %24 = dma.hbm_to_vmem [thread:$0]  %s0, 256, %s19, [#allocation3], 128, 128, 8
    $region5: #{tpu_custom_call.1} parent=1 // pred_fallthru
      _
    // Predicated region
    $region6: #{tpu_custom_call.1} parent=1 // pred_check
      _
    $region7: #{tpu_custom_call.1} parent=1 // pred_check_branch
      %26 = sbr.rel (0) target = $region9
    $region8: #{tpu_custom_call.1} parent=1 // pred_region
      %s28 = ssub.s32 256, 256
      %29 = vsyncadd [#allocation6], %s28
      %s30 = sshll.u32 [#allocation5], 4
      %s31 = int_to_ptr.vmem [resolvable:$true] %s30
      %36 = dma.hbm_to_vmem [thread:$0]  %s1, 256, %s31, [#allocation6], 64, 64, 4
    $region9: #{tpu_custom_call.1} parent=1 // pred_fallthru
      _
    // Predicated region
    $region10: #{tpu_custom_call.1} parent=1 // pred_check
      _
    $region11: #{tpu_custom_call.1} parent=1 // pred_check_branch
      %38 = sbr.rel (0) target = $region13
    $region12: #{tpu_custom_call.1} parent=1 // pred_region
      _
    $region13: #{tpu_custom_call.1} parent=1 // pred_fallthru
      _
    // Predicated region
    $region14: #{tpu_custom_call.1} parent=1 // pred_check
      _
    $region15: #{tpu_custom_call.1} parent=1 // pred_check_branch
      %40 = sbr.rel (0) target = $region17
    $region16: #{tpu_custom_call.1} parent=1 // pred_region
      _
    $region17: #{tpu_custom_call.1} parent=1 // pred_fallthru
      _
    // Predicated region
    $region18: #{tpu_custom_call.1} parent=1 // pred_check
      _
    $region19: #{tpu_custom_call.1} parent=1 // pred_check_branch
      %42 = sbr.rel (0) target = $region21
    $region20: #{tpu_custom_call.1} parent=1 // pred_region
      _
    $region21: #{tpu_custom_call.1} parent=1 // pred_fallthru
      _
    // Predicated region
    $region22: #{tpu_custom_call.1} parent=1 // pred_check
      _
    $region23: #{tpu_custom_call.1} parent=1 // pred_check_branch
      %44 = sbr.rel (0) target = $region25
    $region24: #{tpu_custom_call.1} parent=1 // pred_region
      %45 = dma.done [#allocation3], 256
    $region25: #{tpu_custom_call.1} parent=1 // pred_fallthru
      _
    // Predicated region
    $region26: #{tpu_custom_call.1} parent=1 // pred_check
      _
    $region27: #{tpu_custom_call.1} parent=1 // pred_check_branch
      %47 = sbr.rel (0) target = $region29
    $region28: #{tpu_custom_call.1} parent=1 // pred_region
      %48 = dma.done [#allocation6], 256
    $region29: #{tpu_custom_call.1} parent=1 // pred_fallthru
      _
    %v50 = vld [vmem:[#allocation2] sm:$0xff]
    %v51 = vld [vmem:[#allocation2 + $0x8] sm:$0xff]
    %v52 = vpack.c.bf16 %v51, %v50
    %v53 = vld [vmem:[#allocation5] sm:$0xf]
    %v54 = vld [vmem:[#allocation5 + $0x4] sm:$0xf]
    %v55 = vld [vmem:[#allocation5 + $0x8] sm:$0xf]
    %v56 = vld [vmem:[#allocation5 + $0xc] sm:$0xf]
    %v57 = vld [vmem:[%s2] sm:$0x1]
    %v59 = vlaneseq
    %v60 = vshrl.u32 %v59, 7
    %v61 = vsub.s32 0, %v60
    %v62 = vrot.slane %v57, %v61
    %v68 = vunpack.c.l.b16 %v53
    %v69 = vunpack.c.l.b16 %v54
    %v70 = vunpack.c.l.b16 %v55
    %v71 = vunpack.c.l.b16 %v56
    %v72 = vpack.c.b16 %v69, %v68
    %v73 = vpack.c.b16 %v71, %v70
    %vm76 = vcmask 261120
    %v78 = vsel %vm76, %v52, 0
    %80 = vmatprep.subr.bf16.mxu0 0
    %81 = vmatpush1.bf16.msra.mxu0 %v72
    %82 = vmatprep.subr.bf16.mxu0 0
    %83 = vmatpush1.bf16.msra.mxu0 %v73
    %84 = vmatprep.subr.bf16.mxu0 0
    %85 = vmatpush1.bf16.msra.mxu0 0
    %86 = vmatprep.subr.bf16.mxu0 0
    %87 = vmatpush1.bf16.msra.mxu0 0
    %88 = vmatprep.subr.bf16.mxu0 0
    %89 = vmatpush1.bf16.msra.mxu0 0
    %90 = vmatprep.subr.bf16.mxu0 0
    %91 = vmatpush1.bf16.msra.mxu0 0
    %92 = vmatprep.subr.bf16.mxu0 0
    %93 = vmatpush1.bf16.msra.mxu0 0
    %94 = vmatprep.subr.bf16.mxu0 0
    %95 = vmatpush1.bf16.msra.mxu0 0
    %96 = vmatprep.subr.bf16.mxu0 0
    %97 = vmatpush1.bf16.msra.mxu0 0
    %98 = vmatprep.subr.bf16.mxu0 0
    %99 = vmatpush1.bf16.msra.mxu0 0
    %100 = vmatprep.subr.bf16.mxu0 0
    %101 = vmatpush1.bf16.msra.mxu0 0
    %102 = vmatprep.subr.bf16.mxu0 0
    %103 = vmatpush1.bf16.msra.mxu0 0
    %104 = vmatprep.subr.bf16.mxu0 0
    %105 = vmatpush1.bf16.msra.mxu0 0
    %106 = vmatprep.subr.bf16.mxu0 0
    %107 = vmatpush1.bf16.msra.mxu0 0
    %108 = vmatprep.subr.bf16.mxu0 0
    %109 = vmatpush1.bf16.msra.mxu0 0
    %110 = vmatprep.subr.bf16.mxu0 0
    %111 = vmatpush1.bf16.msra.mxu0 0
    %112 = vmatprep.mubr.bf16.mxu0 0
    %113 = vmatmul.mubr.bf16.gmra.mrb[0].mxu0 %v78
    %v114 = vpop.f32.mrb[0].mxu0
    %v115 = vadd.f32 %v62, %v114
    %v116 = vpop.f32.mrb[0].mxu0
    %v117 = vpop.f32.mrb[0].mxu0
    %v118 = vadd.f32 %v62, %v117
    %v119 = vpop.f32.mrb[0].mxu0
    %120 = vdwg.mxu0
    %v121 = vadd.f32 %v115, %v50
    %v122 = vadd.f32 %v118, %v51
    %v123 = vsel %vm76, %v121, 0.0
    %124 = vadd.xlane.f32.xlu0 %v123
    %v125 = vpop.xlane.xlu0 %124
    %v126 = vsel %vm76, %v122, 0.0
    %127 = vadd.xlane.f32.xlu0 %v126
    %v128 = vpop.xlane.xlu0 %127
    %v129 = vmul.f32 %v121, %v121
    %v130 = vmul.f32 %v122, %v122
    %v131 = vsel %vm76, %v129, 0.0
    %132 = vadd.xlane.f32.xlu0 %v131
    %v133 = vpop.xlane.xlu0 %132
    %v134 = vsel %vm76, %v130, 0.0
    %135 = vadd.xlane.f32.xlu0 %v134
    %v136 = vpop.xlane.xlu0 %135
    %v137 = vmul.f32 %v125, 0.03125
    %v138 = vmul.f32 %v128, 0.03125
    %v139 = vmul.f32 %v133, 0.03125
    %v140 = vmul.f32 %v136, 0.03125
    %v141 = vmul.f32 %v137, %v137
    %v142 = vmul.f32 %v138, %v138
    %v143 = vsub.f32 %v139, %v141
    %v144 = vsub.f32 %v140, %v142
    %v145 = vadd.f32 %v143, 1e-05
    %v146 = vadd.f32 %v144, 1e-05
    %v147 = vrsqrt.pop %v145
    %v148 = vrsqrt.pop %v146
    %v149 = vsub.f32 %v121, %v137
    %v150 = vsub.f32 %v122, %v138
    %v151 = vmul.f32 %v149, %v147
    %v152 = vmul.f32 %v150, %v148
    %v153 = vld [vmem:[%s3] sm:$0x1]
    %v155 = vlaneseq
    %v156 = vshrl.u32 %v155, 7
    %v157 = vsub.s32 0, %v156
    %v158 = vrot.slane %v153, %v157
    %v160 = vmul.f32 %v151, %v158
    %v161 = vmul.f32 %v152, %v158
    %v162 = vld [vmem:[%s4] sm:$0x1]
    %v164 = vlaneseq
    %v165 = vshrl.u32 %v164, 7
    %v166 = vsub.s32 0, %v165
    %v167 = vrot.slane %v162, %v166
    %v169 = vadd.f32 %v160, %v167
    %v170 = vadd.f32 %v161, %v167
    %171 = vst.msk [vmem:[#allocation7] sm:$0xff] %vm76, %v169
    %172 = vst.msk [vmem:[#allocation7 + $0x8] sm:$0xff] %vm76, %v170
    // Predicated region
    $region30: #{tpu_custom_call.1} parent=1 // pred_check
      _
    $region31: #{tpu_custom_call.1} parent=1 // pred_check_branch
      %174 = sbr.rel (0) target = $region33
    $region32: #{tpu_custom_call.1} parent=1 // pred_region
      %s176 = ssub.s32 256, 256
      %177 = vsyncadd [#allocation4], %s176
      %s178 = sshll.u32 [#allocation7], 4
      %s179 = int_to_ptr.vmem [resolvable:$true] %s178
      %184 = dma.vmem_to_hbm [thread:$0]  %s179, 256, %s5, [#allocation4], 128, 128, 8
    $region33: #{tpu_custom_call.1} parent=1 // pred_fallthru
      _
    // Predicated region
    $region34: #{tpu_custom_call.1} parent=1 // pred_check
      _
    $region35: #{tpu_custom_call.1} parent=1 // pred_check_branch
      %186 = sbr.rel (0) target = $region37
    $region36: #{tpu_custom_call.1} parent=1 // pred_region
      %187 = dma.done [#allocation4], 256
    $region37: #{tpu_custom_call.1} parent=1 // pred_fallthru
      _
    %188 = vsyncpa [#allocation3], 1
    %189 = vsyncpa [#allocation6], 1
    %190 = vsyncpa [#allocation4], 1

</llo_original>
